<compile_context>
chip_gen: v7x
topology: tpu7x:2x2x1
jax: 0.10.0
libtpu: 0.0.40
codegen_flags: <defaults>
</compile_context>

<pallas_src>
import jax
import jax.numpy as jnp
from jax.experimental import pallas as pl
from jax.experimental.pallas import tpu as pltpu

_LANE = 128


def _round_up(a: int, b: int) -> int:
    return -(-a // b) * b


def _make_kernel(hw_total: int, t_hw: int, channels: int):
    """Builds the ChannelAttention kernel for static shapes."""
    assert t_hw % _LANE == 0
    n_chunks = t_hw // _LANE
    needs_mask = (hw_total % t_hw) != 0
    inv_hw = 1.0 / float(hw_total)

    def kernel(x_ref, w1_ref, w2_ref, o_ref, max_acc, sum_acc):
        k = pl.program_id(1)
        last = pl.num_programs(1) - 1

        # ---- init resident accumulators at the first spatial tile ---------
        @pl.when(k == 0)
        def _init():
            max_acc[...] = jnp.full(max_acc.shape, -jnp.inf, dtype=max_acc.dtype)
            sum_acc[...] = jnp.zeros(sum_acc.shape, dtype=jnp.float32)

        # ---- streamed reduction over one (C, t_hw) tile --------------------
        def accumulate(masked: bool):
            m = max_acc[...]                              # (C, 128), x.dtype
            s = sum_acc[...]                              # (C, 128), f32
            for j in range(n_chunks):                     # static unroll
                c = x_ref[:, j * _LANE:(j + 1) * _LANE]   # (C, 128), native dtype
                cf = c.astype(jnp.float32)
                if masked:
                    lane = jax.lax.broadcasted_iota(jnp.int32, (1, _LANE), 1)
                    pos = k * t_hw + j * _LANE + lane     # (1, 128)
                    valid = pos < hw_total
                    c = jnp.where(valid, c, jnp.array(-jnp.inf, dtype=c.dtype))
                    cf = jnp.where(valid, cf, 0.0)
                m = jnp.maximum(m, c)                     # VPU elementwise
                s = s + cf                                # VPU elementwise
            max_acc[...] = m
            sum_acc[...] = s

        if needs_mask:
            # Full-speed path for interior tiles; masked path only on the tail.
            @pl.when(k < last)
            def _interior():
                accumulate(False)

            @pl.when(k == last)
            def _tail():
                accumulate(True)
        else:
            accumulate(False)

        # ---- finalize: cross-lane reduce -> fused SE matmuls -> sigmoid ----
        @pl.when(k == last)
        def _finalize():
            # Single cross-lane (XLU) reduce per batch.
            max_c = jnp.max(max_acc[...], axis=1, keepdims=True)     # (C, 1)
            max_c = max_c.astype(jnp.float32)
            avg_c = jnp.sum(sum_acc[...], axis=1, keepdims=True) * inv_hw

            # Stack [max | avg] so both SE branches share one matmul pair.
            pooled = jnp.concatenate([max_c, avg_c], axis=1)          # (C, 2)

            w1 = w1_ref[...].astype(jnp.float32)                      # (C_r, C)
            w2 = w2_ref[...].astype(jnp.float32)                      # (C, C_r)
            h = jnp.dot(w1, pooled, preferred_element_type=jnp.float32)  # (C_r, 2)
            h = jnp.maximum(h, 0.0)                                   # ReLU
            y = jnp.dot(w2, h, preferred_element_type=jnp.float32)    # (C, 2)
            out = jax.nn.sigmoid(y[:, 0:1] + y[:, 1:2])               # (C, 1)
            o_ref[...] = out.astype(o_ref.dtype)                      # store once

    return kernel


def _default_spatial_tile(hw_total: int, channels: int, itemsize: int,
                          target_block_bytes: int = 4 * 1024 * 1024,
                          max_chunks: int = 64) -> int:
    """Lanes of (C, HW) per tile, budgeted with the PADDED block size
    (C padded to 8 sublanes; lanes already a multiple of 128).  Capped at
    max_chunks*128 lanes to bound the static unroll of the chunk loop."""
    c_pad = _round_up(channels, 8)
    lanes = target_block_bytes // max(1, c_pad * itemsize)
    lanes = max(_LANE, (lanes // _LANE) * _LANE)
    lanes = min(lanes, max_chunks * _LANE)
    hw_rounded = _round_up(hw_total, _LANE)
    return int(min(lanes, hw_rounded))


def channel_attention(x, w1, w2, *, t_hw=None,
                      target_block_bytes=4 * 1024 * 1024):
    """ChannelAttention forward.

    x:  (B, C, H, W)  NCHW, like the PyTorch module.
    w1: (C//r, C)     Conv2d(C, C//r, 1, bias=False).weight.squeeze()
    w2: (C, C//r)     Conv2d(C//r, C, 1, bias=False).weight.squeeze()
    Returns sigmoid(se(maxpool(x)) + se(avgpool(x))), shape (B, C, 1, 1).
    """
    B, C, H, W = x.shape
    HW = H * W
    C_r = w1.shape[0]
    assert w1.shape == (C_r, C) and w2.shape == (C, C_r)

    # Free view: H*W is already contiguous/minor in NCHW -- no HBM transpose.
    x3 = x.reshape(B, C, HW)

    itemsize = jnp.dtype(x.dtype).itemsize
    if t_hw is None:
        t_hw = _default_spatial_tile(HW, C, itemsize, target_block_bytes)
    assert t_hw % _LANE == 0 and t_hw >= _LANE, "spatial tile must be a multiple of 128"
    n_hw = pl.cdiv(HW, t_hw)

    kernel = _make_kernel(HW, t_hw, C)

    # VMEM accounting with lane/sublane padding: 2x double-buffered input
    # block + (double-buffered) weights + accumulators + output + slack.
    c_pad = _round_up(C, 8)
    w_itemsize = jnp.dtype(w1.dtype).itemsize
    block_bytes = c_pad * t_hw * itemsize
    w_bytes = (_round_up(C_r, 8) * _round_up(C, _LANE)
               + c_pad * _round_up(C_r, _LANE)) * w_itemsize
    scratch_bytes = c_pad * _LANE * (itemsize + 4)
    out_bytes = c_pad * _LANE * itemsize
    vmem_need = 2 * block_bytes + 2 * w_bytes + scratch_bytes + 2 * out_bytes \
        + (2 << 20)
    vmem_limit = int(min(max(vmem_need, 16 << 20), 32 << 20))

    cost = pl.CostEstimate(
        flops=2 * B * HW * C + 2 * 2 * 2 * B * C * C_r,
        transcendentals=B * C,
        bytes_accessed=(B * HW * C + B * C) * itemsize + 2 * C * C_r * w_itemsize,
    )

    out = pl.pallas_call(
        kernel,
        out_shape=jax.ShapeDtypeStruct((B, C, 1), x.dtype),
        grid=(B, n_hw),
        in_specs=[
            # Streamed (C, t_hw) spatial tiles of the feature map (double-buffered).
            pl.BlockSpec((None, C, t_hw), lambda b, k: (b, 0, k)),
            # Weights: constant index_map -> VMEM-resident, no re-DMA.
            pl.BlockSpec((C_r, C), lambda b, k: (0, 0)),
            pl.BlockSpec((C, C_r), lambda b, k: (0, 0)),
        ],
        out_specs=pl.BlockSpec((None, C, 1), lambda b, k: (b, 0, 0)),
        scratch_shapes=[
            pltpu.VMEM((C, _LANE), x.dtype),      # running max (exact in native dtype)
            pltpu.VMEM((C, _LANE), jnp.float32),  # running sum (f32)
        ],
        compiler_params=pltpu.CompilerParams(
            dimension_semantics=("parallel", "arbitrary"),
            vmem_limit_bytes=vmem_limit,
        ),
        cost_estimate=cost,
    )(x3, w1, w2)

    return out.reshape(B, C, 1, 1)


def reference(x, w1, w2):
    # Pure-JAX reference mirroring the PyTorch forward (computed in f32).
    xf = x.astype(jnp.float32)
    max_p = jnp.max(xf, axis=(2, 3))                  # (B, C)
    avg_p = jnp.mean(xf, axis=(2, 3))                 # (B, C)

    def se(p):
        h = jnp.maximum(p @ w1.T, 0.0)
        return h @ w2.T

    return jax.nn.sigmoid(se(max_p) + se(avg_p)).reshape(
        x.shape[0], x.shape[1], 1, 1)


if __name__ == "__main__":
    B, C, reduction = 2, 64, 16
    hidden = C // reduction                           # 4

    key = jax.random.PRNGKey(0)
    kx, k1, k2, kx2, kx3 = jax.random.split(key, 5)

    # Conv2d(C, C//r, 1, bias=False).weight has shape (C//r, C, 1, 1); squeezed.
    w1 = (jax.random.normal(k1, (hidden, C), dtype=jnp.float32)
          * (1.0 / jnp.sqrt(C)))
    # Conv2d(C//r, C, 1, bias=False).weight has shape (C, C//r, 1, 1); squeezed.
    w2 = (jax.random.normal(k2, (C, hidden), dtype=jnp.float32)
          * (1.0 / jnp.sqrt(hidden)))

    # 1) Main config: 16x16 spatial, default tile (single (C, 256) block).
    x = jax.random.normal(kx, (B, C, 16, 16), dtype=jnp.float32)
    ref = reference(x, w1, w2)
    out = channel_attention(x, w1, w2)
    jax.block_until_ready(out)
    assert out.shape == (B, C, 1, 1)
    assert jnp.allclose(out, ref, atol=1e-5, rtol=1e-5)

    # 2) Pipelined spatial reduction: two 128-lane tiles per batch.
    out2 = channel_attention(x, w1, w2, t_hw=128)
    jax.block_until_ready(out2)
    assert jnp.allclose(out2, ref, atol=1e-5, rtol=1e-5)

    # 3) Ragged tail: H*W = 208 -> last 128-lane tile lane-masked.
    xr = jax.random.normal(kx2, (B, C, 13, 16), dtype=jnp.float32)
    refr = reference(xr, w1, w2)
    outr = channel_attention(xr, w1, w2, t_hw=128)
    jax.block_until_ready(outr)
    assert jnp.allclose(outr, refr, atol=1e-5, rtol=1e-5)

    # 4) H*W (=100) smaller than one 128-lane tile: single fully-masked block.
    xs = jax.random.normal(kx3, (B, C, 10, 10), dtype=jnp.float32)
    refs = reference(xs, w1, w2)
    outs = channel_attention(xs, w1, w2)
    jax.block_until_ready(outs)
    assert jnp.allclose(outs, refs, atol=1e-5, rtol=1e-5)

    # 5) bf16 activations: max path accumulates in bf16 (exact), sum in f32.
    xb = x.astype(jnp.bfloat16)
    refb = reference(xb, w1, w2)
    outb = channel_attention(xb, w1, w2, t_hw=128)
    jax.block_until_ready(outb)
    assert jnp.allclose(outb.astype(jnp.float32), refb, atol=3e-2, rtol=3e-2)

    print("KERNEL_OK")
</pallas_src>

<mosaic_0001>
module attributes {stable_mosaic.version = 11 : i64} {
  func.func @kernel(%arg0: i32, %arg1: i32, %arg2: memref<1x64x256xf32, #tpu.memory_space<vmem>>, %arg3: memref<4x64xf32, #tpu.memory_space<vmem>>, %arg4: memref<64x4xf32, #tpu.memory_space<vmem>>, %arg5: memref<1x64x1xf32, #tpu.memory_space<vmem>>, %arg6: memref<64x128xf32, #tpu.memory_space<vmem>>, %arg7: memref<64x128xf32, #tpu.memory_space<vmem>>) attributes {dimension_semantics = [#tpu.dimension_semantics<parallel>, #tpu.dimension_semantics<arbitrary>], iteration_bounds = array<i64: 2, 1>, scalar_prefetch = 0 : i64, scratch_operands = 2 : i64, tpu.core_type = #tpu.core_type<tc>, window_params = [{transform_indices = @transform_0, window_bounds = array<i64: 1, 64, 256>}, {pipeline_mode = #tpu.pipeline_mode<synchronous>, transform_indices = @transform_1, window_bounds = array<i64: 4, 64>}, {pipeline_mode = #tpu.pipeline_mode<synchronous>, transform_indices = @transform_2, window_bounds = array<i64: 64, 4>}, {transform_indices = @transform_3, window_bounds = array<i64: 1, 64, 1>}]} {
    %c0_i32 = arith.constant 0 : i32
    %0 = arith.cmpi eq, %arg1, %c0_i32 : i32
    %1 = arith.extui %0 : i1 to i32
    %c0_i32_0 = arith.constant 0 : i32
    %2 = arith.cmpi ne, %1, %c0_i32_0 : i32
    scf.if %2 {
      %cst = arith.constant 0xFF800000 : f32
      %18 = vector.broadcast %cst : f32 to vector<64x128xf32>
      %c0_15 = arith.constant 0 : index
      %c0_16 = arith.constant 0 : index
      %19 = vector.load %arg6[%c0_15, %c0_16] : memref<64x128xf32, #tpu.memory_space<vmem>>, vector<64x128xf32>
      tpu.vector_store %arg6[%c0_15, %c0_16], %18 {strides = array<i32>} : memref<64x128xf32, #tpu.memory_space<vmem>>, vector<64x128xf32>,
      %cst_17 = arith.constant 0.000000e+00 : f32
      %20 = vector.broadcast %cst_17 : f32 to vector<64x128xf32>
      %c0_18 = arith.constant 0 : index
      %c0_19 = arith.constant 0 : index
      %21 = vector.load %arg7[%c0_18, %c0_19] : memref<64x128xf32, #tpu.memory_space<vmem>>, vector<64x128xf32>
      tpu.vector_store %arg7[%c0_18, %c0_19], %20 {strides = array<i32>} : memref<64x128xf32, #tpu.memory_space<vmem>>, vector<64x128xf32>,
    } else {
    }
    %c0 = arith.constant 0 : index
    %c0_1 = arith.constant 0 : index
    %3 = vector.load %arg6[%c0, %c0_1] : memref<64x128xf32, #tpu.memory_space<vmem>>, vector<64x128xf32>
    %c0_2 = arith.constant 0 : index
    %c0_3 = arith.constant 0 : index
    %4 = vector.load %arg7[%c0_2, %c0_3] : memref<64x128xf32, #tpu.memory_space<vmem>>, vector<64x128xf32>
    %c0_4 = arith.constant 0 : index
    %c0_5 = arith.constant 0 : index
    %c0_6 = arith.constant 0 : index
    %5 = vector.load %arg2[%c0_4, %c0_5, %c0_6] : memref<1x64x256xf32, #tpu.memory_space<vmem>>, vector<1x64x128xf32>
    %6 = vector.shape_cast %5 : vector<1x64x128xf32> to vector<64x128xf32>
    %7 = arith.maximumf %3, %6 : vector<64x128xf32>
    %8 = arith.addf %4, %6 : vector<64x128xf32>
    %c0_7 = arith.constant 0 : index
    %c0_8 = arith.constant 0 : index
    %c128 = arith.constant 128 : index
    %9 = vector.load %arg2[%c0_7, %c0_8, %c128] : memref<1x64x256xf32, #tpu.memory_space<vmem>>, vector<1x64x128xf32>
    %10 = vector.shape_cast %9 : vector<1x64x128xf32> to vector<64x128xf32>
    %11 = arith.maximumf %7, %10 : vector<64x128xf32>
    %12 = arith.addf %8, %10 : vector<64x128xf32>
    %c0_9 = arith.constant 0 : index
    %c0_10 = arith.constant 0 : index
    %13 = vector.load %arg6[%c0_9, %c0_10] : memref<64x128xf32, #tpu.memory_space<vmem>>, vector<64x128xf32>
    tpu.vector_store %arg6[%c0_9, %c0_10], %11 {strides = array<i32>} : memref<64x128xf32, #tpu.memory_space<vmem>>, vector<64x128xf32>,
    %c0_11 = arith.constant 0 : index
    %c0_12 = arith.constant 0 : index
    %14 = vector.load %arg7[%c0_11, %c0_12] : memref<64x128xf32, #tpu.memory_space<vmem>>, vector<64x128xf32>
    tpu.vector_store %arg7[%c0_11, %c0_12], %12 {strides = array<i32>} : memref<64x128xf32, #tpu.memory_space<vmem>>, vector<64x128xf32>,
    %c0_i32_13 = arith.constant 0 : i32
    %15 = arith.cmpi eq, %arg1, %c0_i32_13 : i32
    %16 = arith.extui %15 : i1 to i32
    %c0_i32_14 = arith.constant 0 : i32
    %17 = arith.cmpi ne, %16, %c0_i32_14 : i32
    scf.if %17 {
      %c0_15 = arith.constant 0 : index
      %c0_16 = arith.constant 0 : index
      %18 = vector.load %arg6[%c0_15, %c0_16] : memref<64x128xf32, #tpu.memory_space<vmem>>, vector<64x128xf32>
      %cst = arith.constant dense<0xFF800000> : vector<64xf32>
      %19 = vector.multi_reduction <maximumf>, %18, %cst [1] : vector<64x128xf32> to vector<64xf32>
      %20 = vector.shape_cast %19 : vector<64xf32> to vector<64x1xf32>
      %c0_17 = arith.constant 0 : index
      %c0_18 = arith.constant 0 : index
      %21 = vector.load %arg7[%c0_17, %c0_18] : memref<64x128xf32, #tpu.memory_space<vmem>>, vector<64x128xf32>
      %cst_19 = arith.constant dense<0.000000e+00> : vector<64xf32>
      %22 = vector.multi_reduction <add>, %21, %cst_19 [1] : vector<64x128xf32> to vector<64xf32>
      %23 = vector.shape_cast %22 : vector<64xf32> to vector<64x1xf32>
      %cst_20 = arith.constant 3.906250e-03 : f32
      %24 = vector.broadcast %cst_20 : f32 to vector<64x1xf32>
      %25 = arith.mulf %23, %24 : vector<64x1xf32>
      %26 = tpu.concatenate %20, %25 in 1 : vector<64x1xf32>, vector<64x1xf32> -> vector<64x2xf32>
      %c0_21 = arith.constant 0 : index
      %c0_22 = arith.constant 0 : index
      %27 = vector.load %arg3[%c0_21, %c0_22] : memref<4x64xf32, #tpu.memory_space<vmem>>, vector<4x64xf32>
      %c0_23 = arith.constant 0 : index
      %c0_24 = arith.constant 0 : index
      %28 = vector.load %arg4[%c0_23, %c0_24] : memref<64x4xf32, #tpu.memory_space<vmem>>, vector<64x4xf32>
      %cst_25 = arith.constant dense<0.000000e+00> : vector<4x2xf32>
      %29 = tpu.matmul %27, %26, %cst_25 {dimension_numbers = #tpu.dot_dimension_numbers<[1], [0], [0], [1], [0, 0, 1, 1], [], []>} : vector<4x64xf32>, vector<64x2xf32>, vector<4x2xf32> -> vector<4x2xf32>
      %cst_26 = arith.constant 0.000000e+00 : f32
      %30 = vector.broadcast %cst_26 : f32 to vector<4x2xf32>
      %31 = arith.maximumf %29, %30 : vector<4x2xf32>
      %cst_27 = arith.constant dense<0.000000e+00> : vector<64x2xf32>
      %32 = tpu.matmul %28, %31, %cst_27 {dimension_numbers = #tpu.dot_dimension_numbers<[1], [0], [0], [1], [0, 0, 1, 1], [], []>} : vector<64x4xf32>, vector<4x2xf32>, vector<64x2xf32> -> vector<64x2xf32>
      %33 = vector.extract_strided_slice %32 {offsets = [0, 0], sizes = [64, 1], strides = [1, 1]} : vector<64x2xf32> to vector<64x1xf32>
      %34 = vector.extract_strided_slice %32 {offsets = [0, 1], sizes = [64, 1], strides = [1, 1]} : vector<64x2xf32> to vector<64x1xf32>
      %35 = arith.addf %33, %34 : vector<64x1xf32>
      %36 = arith.negf %35 : vector<64x1xf32>
      %37 = math.exp %36 : vector<64x1xf32>
      %cst_28 = arith.constant 1.000000e+00 : f32
      %38 = vector.broadcast %cst_28 : f32 to vector<64x1xf32>
      %39 = arith.addf %38, %37 : vector<64x1xf32>
      %40 = arith.divf %38, %39 : vector<64x1xf32>
      %c0_29 = arith.constant 0 : index
      %c0_30 = arith.constant 0 : index
      %c0_31 = arith.constant 0 : index
      %41 = vector.load %arg5[%c0_29, %c0_30, %c0_31] : memref<1x64x1xf32, #tpu.memory_space<vmem>>, vector<1x64x1xf32>
      %42 = vector.shape_cast %41 : vector<1x64x1xf32> to vector<64x1xf32>
      %43 = vector.shape_cast %40 : vector<64x1xf32> to vector<1x64x1xf32>
      tpu.vector_store %arg5[%c0_29, %c0_30, %c0_31], %43 {strides = array<i32>} : memref<1x64x1xf32, #tpu.memory_space<vmem>>, vector<1x64x1xf32>,
    } else {
    }
    return
  }
  func.func @transform_0(%arg0: i32, %arg1: i32) -> (i32, i32, i32) {
    %c0_i32 = arith.constant 0 : i32
    %c0_i32_0 = arith.constant 0 : i32
    return %arg0, %c0_i32, %arg1 : i32, i32, i32
  }
  func.func @transform_1(%arg0: i32, %arg1: i32) -> (i32, i32) {
    %c0_i32 = arith.constant 0 : i32
    %c0_i32_0 = arith.constant 0 : i32
    %c0_i32_1 = arith.constant 0 : i32
    return %c0_i32, %c0_i32_0 : i32, i32
  }
  func.func @transform_2(%arg0: i32, %arg1: i32) -> (i32, i32) {
    %c0_i32 = arith.constant 0 : i32
    %c0_i32_0 = arith.constant 0 : i32
    %c0_i32_1 = arith.constant 0 : i32
    return %c0_i32, %c0_i32_0 : i32, i32
  }
  func.func @transform_3(%arg0: i32, %arg1: i32) -> (i32, i32, i32) {
    %c0_i32 = arith.constant 0 : i32
    %c0_i32_0 = arith.constant 0 : i32
    %c0_i32_1 = arith.constant 0 : i32
    return %arg0, %c0_i32, %c0_i32_0 : i32, i32, i32
  }
}

</mosaic_0001>

<llo_original>
// kernel: tpu_custom_call.1
$region0: #{tpu_custom_call.1}
  #allocation0 [shape = 'u32[]', space=smem, size = 0x4, offset = 0x4, fixed_abs, tag = 'smem constant byte address 0x4 - core index']
  #allocation1 [shape = 'u32[144,128]{1,0:T(1,128)}', space=vmem, size = 0x12000, scoped, tag = 'internal scratch']
  #allocation2 [shape = 'f32[64,128]{1,0:T(8,128)}', space=vmem, size = 0x8000, scoped, tag = 'scratch operand']
  #allocation3 [shape = 'f32[64,128]{1,0:T(8,128)}', space=vmem, size = 0x8000, scoped, tag = 'scratch operand']
  %s0 = inlined_call_operand.hbm [shape: f32[2,64,256], index: 0, kind: input, shape index: {}]
  %s1 = inlined_call_operand.vmem [shape: f32[4,64], index: 1, kind: input, shape index: {}]
  %s2 = inlined_call_operand.vmem [shape: f32[64,4], index: 2, kind: input, shape index: {}]
  %s3 = inlined_call_operand.vmem [shape: f32[2,64,1], index: 3, kind: output, shape index: {}]
  %s4 = sld [smem:[#allocation0]]
  $region57: #{tpu_custom_call.1} parent=0
    _
  %s6 = ssub.s32 1, %s4
  %s7 = scalar_select 0, %s6, %s4
  $region1: #{tpu_custom_call.1} parent=0
    #allocation4 [shape = 'u8[131072]{0}', space=vmem, size = 0x20000, scoped, tag = 'input window, operand 0']
    #allocation5 [shape = 's32[2]{0}', space=sflag, size = 0x8, scoped, tag = 'scoped memory for tpu_custom_call.1']
    %8 = vsyncpa [#allocation5], 0
    %s9 = scalar_lea.sflag [#allocation5], 1
    %10 = vsyncpa %s9, 0
    loop: start=0, step=1, limit=4
    $region2: #{tpu_custom_call.1} parent=1 // loop_pre_header
      _
    $region3: #{tpu_custom_call.1} parent=1 // loop_header
      %s12 = sphi 0, %s16
      %p13 = scmp.ge.s32.totalorder %s12, 4
      %s19 = sphi 0, %s31
      %s20 = sphi 0, %s27
      %s21 = sphi 0, %s19
      %s22 = sphi 0, %s20
      %s23 = sphi 0, %s21
      %s24 = sphi 0, %s22
      %s36 = sphi 0, %s38
      %s39 = sphi 0, %s36
      %s40 = sphi 0, %s39
      %s56 = sphi 0, %s40
      %s60 = sphi 0, %s60
      %s62 = sphi 0, %s60
      %s63 = sphi 0, %s62
      %s77 = sphi 0, %s63
      %s81 = sphi 0, %s81
      %s83 = sphi 0, %s81
      %s84 = sphi 0, %s83
      %s98 = sphi 0, %s84
      %s104 = sphi 0, %s106
      %s107 = sphi 0, %s104
      %s108 = sphi 0, %s107
      %s124 = sphi 0, %s108
    $region4: #{tpu_custom_call.1} parent=1 // loop_header_branch
      %15 = sbr.rel (%p13) target = $region8
    $region5: #{tpu_custom_call.1} parent=1 // loop_body
      %s17 = ssub.s32 %s12, 1
      %s18 = ssub.s32 %s12, 2
      %s25 = sadd.s32 1, %s20
      %p26 = scmp.ge.s32.totalorder %s25, 1
      %s27 = scalar_select %p26, 0, %s25
      %s28 = sadd.s32 1, %s19
      %s29 = scalar_select %p26, %s28, %s19
      %p30 = scmp.ge.s32.totalorder %s29, 2
      %s31 = scalar_select %p30, 0, %s29
      %s32 = ssub.s32 %s19, %s31
      %s33 = ssub.s32 %s20, %s27
      %s34 = sor.u32 %s32, %s33
      %p35 = scmp.eq.s32.totalorder %s34, 0
      %s37 = sadd.s32 %s36, 1
      %s38 = scalar_select %p35, %s36, %s37
      %p41 = pneg %p35
      %p42 = scmp.eq.s32.totalorder %s12, 1
      %p43 = por %p41, %p42
      %p44 = scmp.ne.s32.totalorder %s36, %s39
      %p45 = scmp.eq.s32.totalorder %s12, 0
      %p46 = por %p44, %p45
      %p47 = scmp.ne.s32.totalorder %s36, %s39
      %p48 = scmp.eq.s32.totalorder %s17, 1
      %p49 = por %p47, %p48
      %p50 = scmp.ne.s32.totalorder %s39, %s40
      %p51 = scmp.eq.s32.totalorder %s17, 0
      %p52 = por %p50, %p51
      %p53 = scmp.ne.s32.totalorder %s39, %s40
      %p54 = scmp.eq.s32.totalorder %s18, 1
      %p55 = por %p53, %p54
      %p57 = scmp.ne.s32.totalorder %s40, %s56
      %p58 = scmp.eq.s32.totalorder %s18, 0
      %p59 = por %p57, %p58
      %s61 = sadd.s32 %s60, 1
      %p64 = scmp.eq.s32.totalorder %s12, 1
      %p65 = scmp.ne.s32.totalorder %s60, %s62
      %p66 = scmp.eq.s32.totalorder %s12, 0
      %p67 = por %p65, %p66
      %p68 = scmp.ne.s32.totalorder %s60, %s62
      %p69 = scmp.eq.s32.totalorder %s17, 1
      %p70 = por %p68, %p69
      %p71 = scmp.ne.s32.totalorder %s62, %s63
      %p72 = scmp.eq.s32.totalorder %s17, 0
      %p73 = por %p71, %p72
      %p74 = scmp.ne.s32.totalorder %s62, %s63
      %p75 = scmp.eq.s32.totalorder %s18, 1
      %p76 = por %p74, %p75
      %p78 = scmp.ne.s32.totalorder %s63, %s77
      %p79 = scmp.eq.s32.totalorder %s18, 0
      %p80 = por %p78, %p79
      %s82 = sadd.s32 %s81, 1
      %p85 = scmp.eq.s32.totalorder %s12, 1
      %p86 = scmp.ne.s32.totalorder %s81, %s83
      %p87 = scmp.eq.s32.totalorder %s12, 0
      %p88 = por %p86, %p87
      %p89 = scmp.ne.s32.totalorder %s81, %s83
      %p90 = scmp.eq.s32.totalorder %s17, 1
      %p91 = por %p89, %p90
      %p92 = scmp.ne.s32.totalorder %s83, %s84
      %p93 = scmp.eq.s32.totalorder %s17, 0
      %p94 = por %p92, %p93
      %p95 = scmp.ne.s32.totalorder %s83, %s84
      %p96 = scmp.eq.s32.totalorder %s18, 1
      %p97 = por %p95, %p96
      %p99 = scmp.ne.s32.totalorder %s84, %s98
      %p100 = scmp.eq.s32.totalorder %s18, 0
      %p101 = por %p99, %p100
      %s102 = ssub.s32 %s19, %s31
      %p103 = scmp.eq.s32.totalorder %s102, 0
      %s105 = sadd.s32 %s104, 1
      %s106 = scalar_select %p103, %s104, %s105
      %p109 = pneg %p103
      %p110 = scmp.eq.s32.totalorder %s12, 1
      %p111 = por %p109, %p110
      %p112 = scmp.ne.s32.totalorder %s104, %s107
      %p113 = scmp.eq.s32.totalorder %s12, 0
      %p114 = por %p112, %p113
      %p115 = scmp.ne.s32.totalorder %s104, %s107
      %p116 = scmp.eq.s32.totalorder %s17, 1
      %p117 = por %p115, %p116
      %p118 = scmp.ne.s32.totalorder %s107, %s108
      %p119 = scmp.eq.s32.totalorder %s17, 0
      %p120 = por %p118, %p119
      %p121 = scmp.ne.s32.totalorder %s107, %s108
      %p122 = scmp.eq.s32.totalorder %s18, 1
      %p123 = por %p121, %p122
      %p125 = scmp.ne.s32.totalorder %s108, %s124
      %p126 = scmp.eq.s32.totalorder %s18, 0
      %p127 = por %p125, %p126
      %p128 = scmp.le.s32.totalorder 1, %s12
      %p129 = scmp.lt.s32.totalorder %s12, 3
      %p130 = pnand %p128, %p129
      %p131 = pneg %p130
      // Predicated region
      $region9: #{tpu_custom_call.1} parent=5 // pred_check
        _
      $region10: #{tpu_custom_call.1} parent=5 // pred_check_branch
        %133 = sbr.rel (%p130) target = $region12
      $region11: #{tpu_custom_call.1} parent=5 // pred_region
        %s134 = ssub.s32 %s12, 1
        // Predicated region
        $region13: #{tpu_custom_call.1} parent=11 // pred_check
          %p135 = pneg %p73
        $region14: #{tpu_custom_call.1} parent=11 // pred_check_branch
          %137 = sbr.rel (%p135) target = $region16
        $region15: #{tpu_custom_call.1} parent=11 // pred_region
          _
        $region16: #{tpu_custom_call.1} parent=11 // pred_fallthru
          _
        // Predicated region
        $region17: #{tpu_custom_call.1} parent=11 // pred_check
          %p138 = pneg %p94
        $region18: #{tpu_custom_call.1} parent=11 // pred_check_branch
          %140 = sbr.rel (%p138) target = $region20
        $region19: #{tpu_custom_call.1} parent=11 // pred_region
          _
        $region20: #{tpu_custom_call.1} parent=11 // pred_fallthru
          _
      $region12: #{tpu_custom_call.1} parent=5 // pred_fallthru
        _
      %p141 = scmp.lt.s32.totalorder %s12, 2
      // Predicated region
      $region21: #{tpu_custom_call.1} parent=5 // pred_check
        %p142 = pneg %p141
      $region22: #{tpu_custom_call.1} parent=5 // pred_check_branch
        %144 = sbr.rel (%p142) target = $region24
      $region23: #{tpu_custom_call.1} parent=5 // pred_region
        // Predicated region
        $region25: #{tpu_custom_call.1} parent=23 // pred_check
          %p145 = pneg %p46
        $region26: #{tpu_custom_call.1} parent=23 // pred_check_branch
          %147 = sbr.rel (%p145) target = $region28
        $region27: #{tpu_custom_call.1} parent=23 // pred_region
          %s148 = sand.u32 %s36, 1
          %s149 = scalar_lea.sflag [#allocation5], %s148
          %s150 = sand.u32 %s36, 1
          %s151 = smul.addr %s150, 128
          %s152 = scalar_lea.vmem [#allocation4], %s151
          %s153 = smul.u32 2, %s20
          %s155 = ssub.s32 2048, 2048
          %156 = vsyncadd %s149, %s155
          %s157 = smul.addr %s19, 16
          %s158 = sadd.s32 %s153, %s157
          %s159 = smul.addr %s158, 128
          %s160 = scalar_lea.hbm %s0, %s159
          %s161 = sshll.u32 %s152, 4
          %s162 = int_to_ptr.vmem [resolvable:$true] %s161
          %167 = dma.hbm_to_vmem [thread:$0]  %s160, 2048, %s162, %s149, 256, 256, 16
        $region28: #{tpu_custom_call.1} parent=23 // pred_fallthru
          _
      $region24: #{tpu_custom_call.1} parent=5 // pred_fallthru
        _
      %p168 = scmp.le.s32.totalorder 1, %s12
      %p169 = scmp.lt.s32.totalorder %s12, 3
      %p170 = pnand %p168, %p169
      %p171 = pneg %p170
      // Predicated region
      $region29: #{tpu_custom_call.1} parent=5 // pred_check
        _
      $region30: #{tpu_custom_call.1} parent=5 // pred_check_branch
        %173 = sbr.rel (%p170) target = $region32
      $region31: #{tpu_custom_call.1} parent=5 // pred_region
        %s174 = ssub.s32 %s12, 1
        %s175 = sand.u32 %s39, 1
        %s176 = scalar_lea.sflag [#allocation5], %s175
        %s177 = sand.u32 %s39, 1
        %s178 = smul.addr %s177, 128
        %s179 = scalar_lea.vmem [#allocation4], %s178
        // Predicated region
        $region33: #{tpu_custom_call.1} parent=31 // pred_check
          %p180 = pneg %p52
        $region34: #{tpu_custom_call.1} parent=31 // pred_check_branch
          %182 = sbr.rel (%p180) target = $region36
        $region35: #{tpu_custom_call.1} parent=31 // pred_region
          %183 = dma.done %s176, 2048
        $region36: #{tpu_custom_call.1} parent=31 // pred_fallthru
          _
        %s184 = sand.u32 %s39, 1
        %s185 = scalar_lea.sflag [#allocation5], %s184
        %s186 = sand.u32 %s39, 1
        %s187 = smul.addr %s186, 128
        %s188 = scalar_lea.vmem [#allocation4], %s187
        %p189 = pneg %p52
        %p190 = pneg %p49
        %p191 = pneg %p73
        %p192 = pneg %p70
        %p193 = pneg %p94
        %p194 = pneg %p91
        %p195 = pneg %p120
        %p196 = pneg %p117
        %p197 = scmp.lt.s32.totalorder %s21, 1
        %s198 = scalar_select %p197, %s21, 1
        %s199 = smul.addr %s198, 8
        %s200 = smul.addr %s199, 8
        %s201 = scalar_lea.vmem %s3, %s200
        %s202 = smul.u32 2, %s22
        %p203 = scmp.lt.s32.totalorder %s21, 1
        %s204 = scalar_select %p203, %s21, 1
        %s205 = smul.addr %s204, 8
        %s206 = smul.addr %s205, 8
        %s207 = scalar_lea.vmem %s3, %s206
        %p208 = scmp.eq.s32.totalorder %s22, 0
        // Predicated region
        $region37: #{tpu_custom_call.1} parent=31 // pred_check
          %p209 = pneg %p208
        $region38: #{tpu_custom_call.1} parent=31 // pred_check_branch
          %211 = sbr.rel (%p209) target = $region40
        $region39: #{tpu_custom_call.1} parent=31 // pred_region
          %212 = vst [vmem:[#allocation2] sm:$0xff] -inf
          %213 = vst [vmem:[#allocation2 + $0x8] sm:$0xff] -inf
          %214 = vst [vmem:[#allocation2 + $0x10] sm:$0xff] -inf
          %215 = vst [vmem:[#allocation2 + $0x18] sm:$0xff] -inf
          %216 = vst [vmem:[#allocation2 + $0x20] sm:$0xff] -inf
          %217 = vst [vmem:[#allocation2 + $0x28] sm:$0xff] -inf
          %218 = vst [vmem:[#allocation2 + $0x30] sm:$0xff] -inf
          %219 = vst [vmem:[#allocation2 + $0x38] sm:$0xff] -inf
          %220 = vst [vmem:[#allocation3] sm:$0xff] 0.0
          %221 = vst [vmem:[#allocation3 + $0x8] sm:$0xff] 0.0
          %222 = vst [vmem:[#allocation3 + $0x10] sm:$0xff] 0.0
          %223 = vst [vmem:[#allocation3 + $0x18] sm:$0xff] 0.0
          %224 = vst [vmem:[#allocation3 + $0x20] sm:$0xff] 0.0
          %225 = vst [vmem:[#allocation3 + $0x28] sm:$0xff] 0.0
          %226 = vst [vmem:[#allocation3 + $0x30] sm:$0xff] 0.0
          %227 = vst [vmem:[#allocation3 + $0x38] sm:$0xff] 0.0
        $region40: #{tpu_custom_call.1} parent=31 // pred_fallthru
          _
        %v228 = vld [vmem:[#allocation2] sm:$0xff]
        %v229 = vld [vmem:[#allocation2 + $0x8] sm:$0xff]
        %v230 = vld [vmem:[#allocation2 + $0x10] sm:$0xff]
        %v231 = vld [vmem:[#allocation2 + $0x18] sm:$0xff]
        %v232 = vld [vmem:[#allocation2 + $0x20] sm:$0xff]
        %v233 = vld [vmem:[#allocation2 + $0x28] sm:$0xff]
        %v234 = vld [vmem:[#allocation2 + $0x30] sm:$0xff]
        %v235 = vld [vmem:[#allocation2 + $0x38] sm:$0xff]
        %v236 = vld [vmem:[#allocation3] sm:$0xff]
        %v237 = vld [vmem:[#allocation3 + $0x8] sm:$0xff]
        %v238 = vld [vmem:[#allocation3 + $0x10] sm:$0xff]
        %v239 = vld [vmem:[#allocation3 + $0x18] sm:$0xff]
        %v240 = vld [vmem:[#allocation3 + $0x20] sm:$0xff]
        %v241 = vld [vmem:[#allocation3 + $0x28] sm:$0xff]
        %v242 = vld [vmem:[#allocation3 + $0x30] sm:$0xff]
        %v243 = vld [vmem:[#allocation3 + $0x38] sm:$0xff]
        %v244 = vld [vmem:[%s179] sm:$0xff]
        %v245 = vld [vmem:[%s179 + $0x10] sm:$0xff]
        %v246 = vld [vmem:[%s179 + $0x20] sm:$0xff]
        %v247 = vld [vmem:[%s179 + $0x30] sm:$0xff]
        %v248 = vld [vmem:[%s179 + $0x40] sm:$0xff]
        %v249 = vld [vmem:[%s179 + $0x50] sm:$0xff]
        %v250 = vld [vmem:[%s179 + $0x60] sm:$0xff]
        %v251 = vld [vmem:[%s179 + $0x70] sm:$0xff]
        %v252 = vmax.f32 %v228, %v244
        %v253 = vmax.f32 %v229, %v245
        %v254 = vmax.f32 %v230, %v246
        %v255 = vmax.f32 %v231, %v247
        %v256 = vmax.f32 %v232, %v248
        %v257 = vmax.f32 %v233, %v249
        %v258 = vmax.f32 %v234, %v250
        %v259 = vmax.f32 %v235, %v251
        %v260 = vadd.f32 %v236, %v244
        %v261 = vadd.f32 %v237, %v245
        %v262 = vadd.f32 %v238, %v246
        %v263 = vadd.f32 %v239, %v247
        %v264 = vadd.f32 %v240, %v248
        %v265 = vadd.f32 %v241, %v249
        %v266 = vadd.f32 %v242, %v250
        %v267 = vadd.f32 %v243, %v251
        %v268 = vld [vmem:[%s179 + $0x8] sm:$0xff]
        %v269 = vld [vmem:[%s179 + $0x18] sm:$0xff]
        %v270 = vld [vmem:[%s179 + $0x28] sm:$0xff]
        %v271 = vld [vmem:[%s179 + $0x38] sm:$0xff]
        %v272 = vld [vmem:[%s179 + $0x48] sm:$0xff]
        %v273 = vld [vmem:[%s179 + $0x58] sm:$0xff]
        %v274 = vld [vmem:[%s179 + $0x68] sm:$0xff]
        %v275 = vld [vmem:[%s179 + $0x78] sm:$0xff]
        %v276 = vmax.f32 %v252, %v268
        %v277 = vmax.f32 %v253, %v269
        %v278 = vmax.f32 %v254, %v270
        %v279 = vmax.f32 %v255, %v271
        %v280 = vmax.f32 %v256, %v272
        %v281 = vmax.f32 %v257, %v273
        %v282 = vmax.f32 %v258, %v274
        %v283 = vmax.f32 %v259, %v275
        %v284 = vadd.f32 %v260, %v268
        %v285 = vadd.f32 %v261, %v269
        %v286 = vadd.f32 %v262, %v270
        %v287 = vadd.f32 %v263, %v271
        %v288 = vadd.f32 %v264, %v272
        %v289 = vadd.f32 %v265, %v273
        %v290 = vadd.f32 %v266, %v274
        %v291 = vadd.f32 %v267, %v275
        %292 = vst [vmem:[#allocation2] sm:$0xff] %v276
        %293 = vst [vmem:[#allocation2 + $0x8] sm:$0xff] %v277
        %294 = vst [vmem:[#allocation2 + $0x10] sm:$0xff] %v278
        %295 = vst [vmem:[#allocation2 + $0x18] sm:$0xff] %v279
        %296 = vst [vmem:[#allocation2 + $0x20] sm:$0xff] %v280
        %297 = vst [vmem:[#allocation2 + $0x28] sm:$0xff] %v281
        %298 = vst [vmem:[#allocation2 + $0x30] sm:$0xff] %v282
        %299 = vst [vmem:[#allocation2 + $0x38] sm:$0xff] %v283
        %300 = vst [vmem:[#allocation3] sm:$0xff] %v284
        %301 = vst [vmem:[#allocation3 + $0x8] sm:$0xff] %v285
        %302 = vst [vmem:[#allocation3 + $0x10] sm:$0xff] %v286
        %303 = vst [vmem:[#allocation3 + $0x18] sm:$0xff] %v287
        %304 = vst [vmem:[#allocation3 + $0x20] sm:$0xff] %v288
        %305 = vst [vmem:[#allocation3 + $0x28] sm:$0xff] %v289
        %306 = vst [vmem:[#allocation3 + $0x30] sm:$0xff] %v290
        %307 = vst [vmem:[#allocation3 + $0x38] sm:$0xff] %v291
        // Predicated region
        $region41: #{tpu_custom_call.1} parent=31 // pred_check
          %p308 = pneg %p208
        $region42: #{tpu_custom_call.1} parent=31 // pred_check_branch
          %310 = sbr.rel (%p308) target = $region44
        $region43: #{tpu_custom_call.1} parent=31 // pred_region
          %v311 = vld [vmem:[#allocation2] sm:$0xff]
          %v312 = vld [vmem:[#allocation2 + $0x8] sm:$0xff]
          %v313 = vld [vmem:[#allocation2 + $0x10] sm:$0xff]
          %v314 = vld [vmem:[#allocation2 + $0x18] sm:$0xff]
          %v315 = vld [vmem:[#allocation2 + $0x20] sm:$0xff]
          %v316 = vld [vmem:[#allocation2 + $0x28] sm:$0xff]
          %v317 = vld [vmem:[#allocation2 + $0x30] sm:$0xff]
          %v318 = vld [vmem:[#allocation2 + $0x38] sm:$0xff]
          %319 = vmax.xlane.f32.xlu0 %v311
          %v320 = vpop.xlane.xlu0 %319
          %321 = vmax.xlane.f32.xlu0 %v312
          %v322 = vpop.xlane.xlu0 %321
          %323 = vmax.xlane.f32.xlu0 %v313
          %v324 = vpop.xlane.xlu0 %323
          %325 = vmax.xlane.f32.xlu0 %v314
          %v326 = vpop.xlane.xlu0 %325
          %327 = vmax.xlane.f32.xlu0 %v315
          %v328 = vpop.xlane.xlu0 %327
          %329 = vmax.xlane.f32.xlu0 %v316
          %v330 = vpop.xlane.xlu0 %329
          %331 = vmax.xlane.f32.xlu0 %v317
          %v332 = vpop.xlane.xlu0 %331
          %333 = vmax.xlane.f32.xlu0 %v318
          %v334 = vpop.xlane.xlu0 %333
          %v335 = vld [vmem:[#allocation3] sm:$0xff]
          %v336 = vld [vmem:[#allocation3 + $0x8] sm:$0xff]
          %v337 = vld [vmem:[#allocation3 + $0x10] sm:$0xff]
          %v338 = vld [vmem:[#allocation3 + $0x18] sm:$0xff]
          %v339 = vld [vmem:[#allocation3 + $0x20] sm:$0xff]
          %v340 = vld [vmem:[#allocation3 + $0x28] sm:$0xff]
          %v341 = vld [vmem:[#allocation3 + $0x30] sm:$0xff]
          %v342 = vld [vmem:[#allocation3 + $0x38] sm:$0xff]
          %343 = vadd.xlane.f32.xlu0 %v335
          %v344 = vpop.xlane.xlu0 %343
          %345 = vadd.xlane.f32.xlu0 %v336
          %v346 = vpop.xlane.xlu0 %345
          %347 = vadd.xlane.f32.xlu0 %v337
          %v348 = vpop.xlane.xlu0 %347
          %349 = vadd.xlane.f32.xlu0 %v338
          %v350 = vpop.xlane.xlu0 %349
          %351 = vadd.xlane.f32.xlu0 %v339
          %v352 = vpop.xlane.xlu0 %351
          %353 = vadd.xlane.f32.xlu0 %v340
          %v354 = vpop.xlane.xlu0 %353
          %355 = vadd.xlane.f32.xlu0 %v341
          %v356 = vpop.xlane.xlu0 %355
          %357 = vadd.xlane.f32.xlu0 %v342
          %v358 = vpop.xlane.xlu0 %357
          %v359 = vmul.f32 %v344, 0.00390625
          %v360 = vmul.f32 %v346, 0.00390625
          %v361 = vmul.f32 %v348, 0.00390625
          %v362 = vmul.f32 %v350, 0.00390625
          %v363 = vmul.f32 %v352, 0.00390625
          %v364 = vmul.f32 %v354, 0.00390625
          %v365 = vmul.f32 %v356, 0.00390625
          %v366 = vmul.f32 %v358, 0.00390625
          %vm367 = vcmask 7168
          %v368 = vsel %vm367, %v320, %v359
          %v369 = vsel %vm367, %v322, %v360
          %v370 = vsel %vm367, %v324, %v361
          %v371 = vsel %vm367, %v326, %v362
          %v372 = vsel %vm367, %v328, %v363
          %v373 = vsel %vm367, %v330, %v364
          %v374 = vsel %vm367, %v332, %v365
          %v375 = vsel %vm367, %v334, %v366
          %v376 = vld [vmem:[%s1] sm:$0xf]
          %v377 = vld [vmem:[%s2] sm:$0xff]
          %v378 = vld [vmem:[%s2 + $0x8] sm:$0xff]
          %v379 = vld [vmem:[%s2 + $0x10] sm:$0xff]
          %v380 = vld [vmem:[%s2 + $0x18] sm:$0xff]
          %v381 = vld [vmem:[%s2 + $0x20] sm:$0xff]
          %v382 = vld [vmem:[%s2 + $0x28] sm:$0xff]
          %v383 = vld [vmem:[%s2 + $0x30] sm:$0xff]
          %v384 = vld [vmem:[%s2 + $0x38] sm:$0xff]
          %vm385 = vcmask 523264
          %v387 = vsel %vm385, %v376, 0
          %389 = vmatprep.subr.mxu0 0.0
          %390 = vmatpush1.msra.mxu0 %v368
          %391 = vmatprep.subr.mxu0 0.0
          %392 = vmatpush1.msra.mxu0 %v369
          %393 = vmatprep.subr.mxu0 0.0
          %394 = vmatpush1.msra.mxu0 %v370
          %395 = vmatprep.subr.mxu0 0.0
          %396 = vmatpush1.msra.mxu0 %v371
          %397 = vmatprep.subr.mxu0 0.0
          %398 = vmatpush1.msra.mxu0 %v372
          %399 = vmatprep.subr.mxu0 0.0
          %400 = vmatpush1.msra.mxu0 %v373
          %401 = vmatprep.subr.mxu0 0.0
          %402 = vmatpush1.msra.mxu0 %v374
          %403 = vmatprep.subr.mxu0 0.0
          %404 = vmatpush1.msra.mxu0 %v375
          %405 = vmatprep.subr.mxu0 0.0
          %406 = vmatpush1.msra.mxu0 0.0
          %407 = vmatprep.subr.mxu0 0.0
          %408 = vmatpush1.msra.mxu0 0.0
          %409 = vmatprep.subr.mxu0 0.0
          %410 = vmatpush1.msra.mxu0 0.0
          %411 = vmatprep.subr.mxu0 0.0
          %412 = vmatpush1.msra.mxu0 0.0
          %413 = vmatprep.subr.mxu0 0.0
          %414 = vmatpush1.msra.mxu0 0.0
          %415 = vmatprep.subr.mxu0 0.0
          %416 = vmatpush1.msra.mxu0 0.0
          %417 = vmatprep.subr.mxu0 0.0
          %418 = vmatpush1.msra.mxu0 0.0
          %419 = vmatprep.subr.mxu0 0.0
          %420 = vmatpush1.msra.mxu0 0.0
          %421 = vmatprep.subr.mxu0 0.0
          %422 = vmatpush1.msra.mxu0 0.0
          %423 = vmatprep.subr.mxu0 0.0
          %424 = vmatpush1.msra.mxu0 0.0
          %425 = vmatprep.subr.mxu0 0.0
          %426 = vmatpush1.msra.mxu0 0.0
          %427 = vmatprep.subr.mxu0 0.0
          %428 = vmatpush1.msra.mxu0 0.0
          %429 = vmatprep.subr.mxu0 0.0
          %430 = vmatpush1.msra.mxu0 0.0
          %431 = vmatprep.subr.mxu0 0.0
          %432 = vmatpush1.msra.mxu0 0.0
          %433 = vmatprep.subr.mxu0 0.0
          %434 = vmatpush1.msra.mxu0 0.0
          %435 = vmatprep.subr.mxu0 0.0
          %436 = vmatpush1.msra.mxu0 0.0
          %437 = vmatprep.subr.mxu0 0.0
          %438 = vmatpush1.msra.mxu0 0.0
          %439 = vmatprep.subr.mxu0 0.0
          %440 = vmatpush1.msra.mxu0 0.0
          %441 = vmatprep.subr.mxu0 0.0
          %442 = vmatpush1.msra.mxu0 0.0
          %443 = vmatprep.subr.mxu0 0.0
          %444 = vmatpush1.msra.mxu0 0.0
          %445 = vmatprep.subr.mxu0 0.0
          %446 = vmatpush1.msra.mxu0 0.0
          %447 = vmatprep.subr.mxu0 0.0
          %448 = vmatpush1.msra.mxu0 0.0
          %449 = vmatprep.subr.mxu0 0.0
          %450 = vmatpush1.msra.mxu0 0.0
          %451 = vmatprep.subr.mxu0 0.0
          %452 = vmatpush1.msra.mxu0 0.0
          %453 = vmatprep.mubr.f32.mxu0 0.0
          %454 = vmatmul.mubr.f32.gmra.mrb[0].mxu0 %v387
          %v455 = vpop.f32.mrb[0].mxu0
          %v456 = vadd.f32 0.0, %v455
          %v457 = vpop.f32.mrb[0].mxu0
          %458 = vdwg.mxu0
          %v459 = vmax.f32 %v456, 0.0
          %vm460 = vcmask 31744
          %v462 = vsel %vm460, %v377, 0
          %v465 = vsel %vm460, %v378, 0
          %v468 = vsel %vm460, %v379, 0
          %v471 = vsel %vm460, %v380, 0
          %v474 = vsel %vm460, %v381, 0
          %v477 = vsel %vm460, %v382, 0
          %v480 = vsel %vm460, %v383, 0
          %v483 = vsel %vm460, %v384, 0
          %vm485 = vcmask 1043456
          %v487 = vsel %vm485, %v459, 0
          %489 = vmatprep.subr.mxu0 0.0
          %490 = vmatpush1.msra.mxu0 %v487
          %491 = vmatprep.subr.mxu0 0.0
          %492 = vmatpush1.msra.mxu0 0.0
          %493 = vmatprep.subr.mxu0 0.0
          %494 = vmatpush1.msra.mxu0 0.0
          %495 = vmatprep.subr.mxu0 0.0
          %496 = vmatpush1.msra.mxu0 0.0
          %497 = vmatprep.subr.mxu0 0.0
          %498 = vmatpush1.msra.mxu0 0.0
          %499 = vmatprep.subr.mxu0 0.0
          %500 = vmatpush1.msra.mxu0 0.0
          %501 = vmatprep.subr.mxu0 0.0
          %502 = vmatpush1.msra.mxu0 0.0
          %503 = vmatprep.subr.mxu0 0.0
          %504 = vmatpush1.msra.mxu0 0.0
          %505 = vmatprep.subr.mxu0 0.0
          %506 = vmatpush1.msra.mxu0 0.0
          %507 = vmatprep.subr.mxu0 0.0
          %508 = vmatpush1.msra.mxu0 0.0
          %509 = vmatprep.subr.mxu0 0.0
          %510 = vmatpush1.msra.mxu0 0.0
          %511 = vmatprep.subr.mxu0 0.0
          %512 = vmatpush1.msra.mxu0 0.0
          %513 = vmatprep.subr.mxu0 0.0
          %514 = vmatpush1.msra.mxu0 0.0
          %515 = vmatprep.subr.mxu0 0.0
          %516 = vmatpush1.msra.mxu0 0.0
          %517 = vmatprep.subr.mxu0 0.0
          %518 = vmatpush1.msra.mxu0 0.0
          %519 = vmatprep.subr.mxu0 0.0
          %520 = vmatpush1.msra.mxu0 0.0
          %521 = vmatprep.subr.mxu0 0.0
          %522 = vmatpush1.msra.mxu0 0.0
          %523 = vmatprep.subr.mxu0 0.0
          %524 = vmatpush1.msra.mxu0 0.0
          %525 = vmatprep.subr.mxu0 0.0
          %526 = vmatpush1.msra.mxu0 0.0
          %527 = vmatprep.subr.mxu0 0.0
          %528 = vmatpush1.msra.mxu0 0.0
          %529 = vmatprep.subr.mxu0 0.0
          %530 = vmatpush1.msra.mxu0 0.0
          %531 = vmatprep.subr.mxu0 0.0
          %532 = vmatpush1.msra.mxu0 0.0
          %533 = vmatprep.subr.mxu0 0.0
          %534 = vmatpush1.msra.mxu0 0.0
          %535 = vmatprep.subr.mxu0 0.0
          %536 = vmatpush1.msra.mxu0 0.0
          %537 = vmatprep.subr.mxu0 0.0
          %538 = vmatpush1.msra.mxu0 0.0
          %539 = vmatprep.subr.mxu0 0.0
          %540 = vmatpush1.msra.mxu0 0.0
          %541 = vmatprep.subr.mxu0 0.0
          %542 = vmatpush1.msra.mxu0 0.0
          %543 = vmatprep.subr.mxu0 0.0
          %544 = vmatpush1.msra.mxu0 0.0
          %545 = vmatprep.subr.mxu0 0.0
          %546 = vmatpush1.msra.mxu0 0.0
          %547 = vmatprep.subr.mxu0 0.0
          %548 = vmatpush1.msra.mxu0 0.0
          %549 = vmatprep.subr.mxu0 0.0
          %550 = vmatpush1.msra.mxu0 0.0
          %551 = vmatprep.subr.mxu0 0.0
          %552 = vmatpush1.msra.mxu0 0.0
          %553 = vmatprep.mubr.f32.mxu0 0.0
          %554 = vmatmul.mubr.f32.gmra.mrb[0].mxu0 %v462
          %v555 = vpop.f32.mrb[0].mxu0
          %v556 = vadd.f32 0.0, %v555
          %v557 = vpop.f32.mrb[0].mxu0
          %558 = vmatprep.mubr.f32.mxu0 0.0
          %559 = vmatmul.mubr.f32.gmra.mrb[0].mxu0 %v465
          %v560 = vpop.f32.mrb[0].mxu0
          %v561 = vadd.f32 0.0, %v560
          %v562 = vpop.f32.mrb[0].mxu0
          %563 = vmatprep.mubr.f32.mxu0 0.0
          %564 = vmatmul.mubr.f32.gmra.mrb[0].mxu0 %v468
          %v565 = vpop.f32.mrb[0].mxu0
          %v566 = vadd.f32 0.0, %v565
          %v567 = vpop.f32.mrb[0].mxu0
          %568 = vmatprep.mubr.f32.mxu0 0.0
          %569 = vmatmul.mubr.f32.gmra.mrb[0].mxu0 %v471
          %v570 = vpop.f32.mrb[0].mxu0
          %v571 = vadd.f32 0.0, %v570
          %v572 = vpop.f32.mrb[0].mxu0
          %573 = vmatprep.mubr.f32.mxu0 0.0
          %574 = vmatmul.mubr.f32.gmra.mrb[0].mxu0 %v474
          %v575 = vpop.f32.mrb[0].mxu0
          %v576 = vadd.f32 0.0, %v575
          %v577 = vpop.f32.mrb[0].mxu0
          %578 = vmatprep.mubr.f32.mxu0 0.0
          %579 = vmatmul.mubr.f32.gmra.mrb[0].mxu0 %v477
          %v580 = vpop.f32.mrb[0].mxu0
          %v581 = vadd.f32 0.0, %v580
          %v582 = vpop.f32.mrb[0].mxu0
          %583 = vmatprep.mubr.f32.mxu0 0.0
          %584 = vmatmul.mubr.f32.gmra.mrb[0].mxu0 %v480
          %v585 = vpop.f32.mrb[0].mxu0
          %v586 = vadd.f32 0.0, %v585
          %v587 = vpop.f32.mrb[0].mxu0
          %588 = vmatprep.mubr.f32.mxu0 0.0
          %589 = vmatmul.mubr.f32.gmra.mrb[0].mxu0 %v483
          %v590 = vpop.f32.mrb[0].mxu0
          %v591 = vadd.f32 0.0, %v590
          %v592 = vpop.f32.mrb[0].mxu0
          %593 = vdwg.mxu0
          %602 = vrot.lane.b32.xlu0 %v556, 127
          %v603 = vpop.permute.xlu0 %602
          %604 = vrot.lane.b32.xlu0 %v561, 127
          %v605 = vpop.permute.xlu0 %604
          %606 = vrot.lane.b32.xlu0 %v566, 127
          %v607 = vpop.permute.xlu0 %606
          %608 = vrot.lane.b32.xlu0 %v571, 127
          %v609 = vpop.permute.xlu0 %608
          %610 = vrot.lane.b32.xlu0 %v576, 127
          %v611 = vpop.permute.xlu0 %610
          %612 = vrot.lane.b32.xlu0 %v581, 127
          %v613 = vpop.permute.xlu0 %612
          %614 = vrot.lane.b32.xlu0 %v586, 127
          %v615 = vpop.permute.xlu0 %614
          %616 = vrot.lane.b32.xlu0 %v591, 127
          %v617 = vpop.permute.xlu0 %616
          %v626 = vadd.f32 %v556, %v603
          %v627 = vadd.f32 %v561, %v605
          %v628 = vadd.f32 %v566, %v607
          %v629 = vadd.f32 %v571, %v609
          %v630 = vadd.f32 %v576, %v611
          %v631 = vadd.f32 %v581, %v613
          %v632 = vadd.f32 %v586, %v615
          %v633 = vadd.f32 %v591, %v617
          %v634 = vxor.u32 %v626, 2147483648
          %v635 = vxor.u32 %v627, 2147483648
          %v636 = vxor.u32 %v628, 2147483648
          %v637 = vxor.u32 %v629, 2147483648
          %v638 = vxor.u32 %v630, 2147483648
          %v639 = vxor.u32 %v631, 2147483648
          %v640 = vxor.u32 %v632, 2147483648
          %v641 = vxor.u32 %v633, 2147483648
          %v642 = vmul.f32 %v634, 1.442695
          %v643 = vpow.pop %v642
          %v644 = vmul.f32 %v635, 1.442695
          %v645 = vpow.pop %v644
          %v646 = vmul.f32 %v636, 1.442695
          %v647 = vpow.pop %v646
          %v648 = vmul.f32 %v637, 1.442695
          %v649 = vpow.pop %v648
          %v650 = vmul.f32 %v638, 1.442695
          %v651 = vpow.pop %v650
          %v652 = vmul.f32 %v639, 1.442695
          %v653 = vpow.pop %v652
          %v654 = vmul.f32 %v640, 1.442695
          %v655 = vpow.pop %v654
          %v656 = vmul.f32 %v641, 1.442695
          %v657 = vpow.pop %v656
          %v658 = vadd.f32 %v643, 1.0
          %v659 = vadd.f32 %v645, 1.0
          %v660 = vadd.f32 %v647, 1.0
          %v661 = vadd.f32 %v649, 1.0
          %v662 = vadd.f32 %v651, 1.0
          %v663 = vadd.f32 %v653, 1.0
          %v664 = vadd.f32 %v655, 1.0
          %v665 = vadd.f32 %v657, 1.0
          %v666 = vrcp.pop %v658
          %v667 = vmul.f32 1.0, %v666
          %v668 = vrcp.pop %v659
          %v669 = vmul.f32 1.0, %v668
          %v670 = vrcp.pop %v660
          %v671 = vmul.f32 1.0, %v670
          %v672 = vrcp.pop %v661
          %v673 = vmul.f32 1.0, %v672
          %v674 = vrcp.pop %v662
          %v675 = vmul.f32 1.0, %v674
          %v676 = vrcp.pop %v663
          %v677 = vmul.f32 1.0, %v676
          %v678 = vrcp.pop %v664
          %v679 = vmul.f32 1.0, %v678
          %v680 = vrcp.pop %v665
          %v681 = vmul.f32 1.0, %v680
          %682 = vst.msk [vmem:[%s207] sm:$0xff] %vm367, %v667
          %683 = vst.msk [vmem:[%s207 + $0x8] sm:$0xff] %vm367, %v669
          %684 = vst.msk [vmem:[%s207 + $0x10] sm:$0xff] %vm367, %v671
          %685 = vst.msk [vmem:[%s207 + $0x18] sm:$0xff] %vm367, %v673
          %686 = vst.msk [vmem:[%s207 + $0x20] sm:$0xff] %vm367, %v675
          %687 = vst.msk [vmem:[%s207 + $0x28] sm:$0xff] %vm367, %v677
          %688 = vst.msk [vmem:[%s207 + $0x30] sm:$0xff] %vm367, %v679
          %689 = vst.msk [vmem:[%s207 + $0x38] sm:$0xff] %vm367, %v681
        $region44: #{tpu_custom_call.1} parent=31 // pred_fallthru
          _
        %p690 = scmp.lt.s32.totalorder %s21, 1
        %s691 = scalar_select %p690, %s21, 1
        %s692 = smul.addr %s691, 8
        %s693 = smul.addr %s692, 8
        %s694 = scalar_lea.vmem %s3, %s693
        // Predicated region
        $region45: #{tpu_custom_call.1} parent=31 // pred_check
          %p695 = pneg %p117
        $region46: #{tpu_custom_call.1} parent=31 // pred_check_branch
          %697 = sbr.rel (%p695) target = $region48
        $region47: #{tpu_custom_call.1} parent=31 // pred_region
          _
        $region48: #{tpu_custom_call.1} parent=31 // pred_fallthru
          _
      $region32: #{tpu_custom_call.1} parent=5 // pred_fallthru
        _
      %p698 = scmp.le.s32.totalorder 2, %s12
      // Predicated region
      $region49: #{tpu_custom_call.1} parent=5 // pred_check
        %p699 = pneg %p698
      $region50: #{tpu_custom_call.1} parent=5 // pred_check_branch
        %701 = sbr.rel (%p699) target = $region52
      $region51: #{tpu_custom_call.1} parent=5 // pred_region
        %s702 = ssub.s32 %s12, 2
        // Predicated region
        $region53: #{tpu_custom_call.1} parent=51 // pred_check
          %p703 = pneg %p123
        $region54: #{tpu_custom_call.1} parent=51 // pred_check_branch
          %705 = sbr.rel (%p703) target = $region56
        $region55: #{tpu_custom_call.1} parent=51 // pred_region
          %p706 = scmp.lt.s32.totalorder %s23, 1
          %s707 = scalar_select %p706, %s23, 1
          %s708 = smul.addr %s707, 8
          %s709 = smul.addr %s708, 8
          %s710 = scalar_lea.vmem %s3, %s709
        $region56: #{tpu_custom_call.1} parent=51 // pred_fallthru
          _
      $region52: #{tpu_custom_call.1} parent=5 // pred_fallthru
        _
    $region6: #{tpu_custom_call.1} parent=1 // loop_footer
      %s16 = sadd.s32 1, %s12
    $region7: #{tpu_custom_call.1} parent=1 // loop_footer_branch
      %11 = sbr.rel target = $region3
    $region8: #{tpu_custom_call.1} parent=1 // loop_exit
      _
    %711 = vsyncpa [#allocation5], 1
    %s712 = scalar_lea.sflag [#allocation5], 1
    %713 = vsyncpa %s712, 1

</llo_original>
